<compile_context>
chip_gen: v7x
topology: tpu7x:2x2x1
jax: 0.10.0
libtpu: 0.0.40
codegen_flags: <defaults>
</compile_context>

<pallas_src>
import functools

import jax
import jax.numpy as jnp
from jax.experimental import pallas as pl
from jax.experimental.pallas import tpu as pltpu

EPS = 1e-5
GROWTH = 32
TM = 512                        # row tile for all M-tiled kernels
VMEM_LIMIT = 32 * 1024 * 1024   # safe scoped-VMEM budget on v5e/v6e/v7x


def _row_tile(m):
    return m if m <= TM else TM


def _mosaic(*semantics):
    return pltpu.CompilerParams(dimension_semantics=tuple(semantics),
                                vmem_limit_bytes=VMEM_LIMIT)


# --------------------------------------------------------------------------
# Pallas kernels
# --------------------------------------------------------------------------
def _matmul_kernel(x_ref, w_ref, o_ref):
    # bf16 x bf16 -> f32 accumulation on the MXU.
    o_ref[...] = jnp.dot(x_ref[...], w_ref[...],
                         preferred_element_type=jnp.float32)


def matmul(x, w):
    """x: [M, K] bf16, w: [K, N] bf16 -> [M, N] f32 (M-tiled, parallel)."""
    x = x.astype(jnp.bfloat16)
    w = w.astype(jnp.bfloat16)
    M, K = x.shape
    K2, N = w.shape
    assert K == K2
    tm = _row_tile(M)
    return pl.pallas_call(
        _matmul_kernel,
        out_shape=jax.ShapeDtypeStruct((M, N), jnp.float32),
        grid=(pl.cdiv(M, tm),),
        in_specs=[pl.BlockSpec((tm, K), lambda i: (i, 0)),
                  pl.BlockSpec((K, N), lambda i: (0, 0))],
        out_specs=pl.BlockSpec((tm, N), lambda i: (i, 0)),
        compiler_params=_mosaic("parallel"),
    )(x, w)


def _matmul_bias_kernel(x_ref, w_ref, b_ref, o_ref):
    o_ref[...] = (jnp.dot(x_ref[...], w_ref[...],
                          preferred_element_type=jnp.float32) + b_ref[...])


def matmul_bias(x, w, b_row):
    """Classifier head: f32 [M, K] @ [K, N] + [1, N]."""
    M, K = x.shape
    _, N = w.shape
    tm = _row_tile(M)
    return pl.pallas_call(
        _matmul_bias_kernel,
        out_shape=jax.ShapeDtypeStruct((M, N), jnp.float32),
        grid=(pl.cdiv(M, tm),),
        in_specs=[pl.BlockSpec((tm, K), lambda i: (i, 0)),
                  pl.BlockSpec((K, N), lambda i: (0, 0)),
                  pl.BlockSpec((1, N), lambda i: (0, 0))],
        out_specs=pl.BlockSpec((tm, N), lambda i: (i, 0)),
        compiler_params=_mosaic("parallel"),
    )(x, w, b_row)


def _bn_stats_kernel(y_ref, sum_ref, sq_ref, *, m_true, tm):
    i = pl.program_id(0)

    @pl.when(i == 0)
    def _():
        sum_ref[...] = jnp.zeros_like(sum_ref)
        sq_ref[...] = jnp.zeros_like(sq_ref)

    y = y_ref[...].astype(jnp.float32)
    rows = jax.lax.broadcasted_iota(jnp.int32, y.shape, 0) + i * tm
    y = jnp.where(rows < m_true, y, 0.0)          # mask ragged tail rows
    sum_ref[...] += jnp.sum(y, axis=0, keepdims=True)
    sq_ref[...] += jnp.sum(y * y, axis=0, keepdims=True)


def _bn_apply_relu_kernel(y_ref, scale_ref, shift_ref, o_ref):
    y = y_ref[...].astype(jnp.float32)
    o_ref[...] = jnp.maximum(y * scale_ref[...] + shift_ref[...],
                             0.0).astype(o_ref.dtype)


def batchnorm_relu(y, gamma, beta, out_dtype=jnp.bfloat16):
    """Training-mode (batch-statistics) BatchNorm + ReLU over rows of [M, C].

    Pass 1: M-tiled masked reduction -> per-channel sum / sum-of-squares.
    Pass 2: M-tiled scale/shift + ReLU (parallel), bf16 output.
    """
    M, C = y.shape
    tm = _row_tile(M)
    grid = (pl.cdiv(M, tm),)

    s, q = pl.pallas_call(
        functools.partial(_bn_stats_kernel, m_true=M, tm=tm),
        out_shape=(jax.ShapeDtypeStruct((1, C), jnp.float32),
                   jax.ShapeDtypeStruct((1, C), jnp.float32)),
        grid=grid,
        in_specs=[pl.BlockSpec((tm, C), lambda i: (i, 0))],
        out_specs=[pl.BlockSpec((1, C), lambda i: (0, 0)),
                   pl.BlockSpec((1, C), lambda i: (0, 0))],
        compiler_params=_mosaic("arbitrary"),
    )(y)

    mean = s / M
    var = jnp.maximum(q / M - mean * mean, 0.0)
    scale = gamma.reshape(1, C).astype(jnp.float32) * jax.lax.rsqrt(var + EPS)
    shift = beta.reshape(1, C).astype(jnp.float32) - mean * scale

    return pl.pallas_call(
        _bn_apply_relu_kernel,
        out_shape=jax.ShapeDtypeStruct((M, C), out_dtype),
        grid=grid,
        in_specs=[pl.BlockSpec((tm, C), lambda i: (i, 0)),
                  pl.BlockSpec((1, C), lambda i: (0, 0)),
                  pl.BlockSpec((1, C), lambda i: (0, 0))],
        out_specs=pl.BlockSpec((tm, C), lambda i: (i, 0)),
        compiler_params=_mosaic("parallel"),
    )(y, scale, shift)


# --------------------------------------------------------------------------
# JAX glue: im2col patch extraction, pooling
# --------------------------------------------------------------------------
def im2col(x, kh, kw, stride, pad):
    """x: [N, H, W, C] -> ([N*Hout*Wout, kh*kw*C], (N, Hout, Wout)); keeps dtype."""
    # TODO(synk): lower 3x3 convs as 9 shifted accumulating matmuls in-kernel
    # to avoid materializing the 9x-expanded column buffer in HBM.
    N, H, W, C = x.shape
    if pad > 0:
        x = jnp.pad(x, ((0, 0), (pad, pad), (pad, pad), (0, 0)))
    Hout = (H + 2 * pad - kh) // stride + 1
    Wout = (W + 2 * pad - kw) // stride + 1
    patches = []
    for i in range(kh):
        for j in range(kw):
            p = jax.lax.slice(
                x,
                (0, i, j, 0),
                (N, i + stride * (Hout - 1) + 1, j + stride * (Wout - 1) + 1, C),
                (1, stride, stride, 1),
            )
            patches.append(p)
    col = jnp.stack(patches, axis=3).reshape(N, Hout, Wout, kh * kw * C)
    return col.reshape(N * Hout * Wout, kh * kw * C), (N, Hout, Wout)


def maxpool_3x3_s2_p1(x):
    # TODO(synk): pooling stays as JAX reduce_window glue (tiny fraction of FLOPs).
    y = jax.lax.reduce_window(
        x.astype(jnp.float32), -jnp.inf, jax.lax.max,
        window_dimensions=(1, 3, 3, 1),
        window_strides=(1, 2, 2, 1),
        padding=((0, 0), (1, 1), (1, 1), (0, 0)),
    )
    return y.astype(jnp.bfloat16)


def avgpool_2x2(x):
    N, H, W, C = x.shape
    y = x.astype(jnp.float32).reshape(N, H // 2, 2, W // 2, 2, C).mean(axis=(2, 4))
    return y.astype(jnp.bfloat16)


# --------------------------------------------------------------------------
# Network building blocks
# --------------------------------------------------------------------------
def _dense_layer(feat, w1p, g1, b1, w2, g2, b2, col_off, *, N, H, W):
    """One DenseLayer: 1x1 conv -> BN -> ReLU -> 3x3 conv -> BN -> ReLU,
    writing the 32-channel result in place into the block's feature slab."""
    # 1x1 conv over the whole slab; rows of w1p beyond the currently valid
    # channel count are zero, so not-yet-written (zero) channels contribute 0.
    y1 = matmul(feat, w1p)                              # [M, 32] f32
    a1 = batchnorm_relu(y1, g1, b1)                     # [M, 32] bf16
    # 3x3 conv, stride 1, pad 1
    cols, _ = im2col(a1.reshape(N, H, W, GROWTH), 3, 3, 1, 1)
    y2 = matmul(cols, w2)                               # [M, 32] f32
    a2 = batchnorm_relu(y2, g2, b2)                     # [M, 32] bf16
    return jax.lax.dynamic_update_slice(feat, a2, (0, col_off))


# Donated jit: the feature slab is updated in place (no per-layer concat copy).
_dense_layer_jit = jax.jit(_dense_layer, static_argnames=("N", "H", "W"),
                           donate_argnums=(0,))


def dense_block(x, layer_params, c0):
    """x: [N, H, W, c0] bf16 -> [N, H, W, c0 + 32*L] bf16 (the feature slab)."""
    N, H, W, _ = x.shape
    M = N * H * W
    cf = c0 + GROWTH * len(layer_params)
    feat = jnp.zeros((M, cf), jnp.bfloat16)
    feat = jax.lax.dynamic_update_slice(feat, x.reshape(M, c0), (0, 0))
    for i, p in enumerate(layer_params):
        feat = _dense_layer_jit(feat, p["w1p"], p["g1"], p["b1"],
                                p["w2"], p["g2"], p["b2"],
                                c0 + GROWTH * i, N=N, H=H, W=W)
    return feat.reshape(N, H, W, cf)


def transition_block(x, p):
    N, H, W, C = x.shape
    y = matmul(x.reshape(N * H * W, C), p["w"])         # 1x1 conv
    a = batchnorm_relu(y, p["g"], p["b"])
    return avgpool_2x2(a.reshape(N, H, W, C // 2))


def densenet121_forward(x_nchw, params):
    x = jnp.transpose(x_nchw, (0, 2, 3, 1)).astype(jnp.bfloat16)   # NCHW -> NHWC

    # Stem: 7x7/2 conv -> BN -> ReLU -> 3x3/2 maxpool
    cols, (n, ho, wo) = im2col(x, 7, 7, 2, 3)
    y = matmul(cols, params["stem_w"])
    a = batchnorm_relu(y, params["stem_g"], params["stem_b"])
    x = maxpool_3x3_s2_p1(a.reshape(n, ho, wo, 64))

    # Dense blocks + transitions
    x = dense_block(x, params["block0"], 64)       # -> 256 channels
    x = transition_block(x, params["trans0"])      # -> 128, /2
    x = dense_block(x, params["block1"], 128)      # -> 512
    x = transition_block(x, params["trans1"])      # -> 256, /2
    x = dense_block(x, params["block2"], 256)      # -> 1024
    x = transition_block(x, params["trans2"])      # -> 512, /2
    x = dense_block(x, params["block3"], 512)      # -> 1024

    # Final BN + ReLU + adaptive avg pool (1,1) + classifier
    N, H, W, C = x.shape
    a = batchnorm_relu(x.reshape(N * H * W, C),
                       params["final_g"], params["final_b"])
    pooled = a.reshape(N, H, W, C).astype(jnp.float32).mean(axis=(1, 2))
    logits = matmul_bias(pooled, params["fc_w"], params["fc_b"].reshape(1, -1))
    return logits


# --------------------------------------------------------------------------
# Deterministic parameter construction (kaiming-ish conv init, BN gamma=1 /
# beta=0).  Conv weights stored in bf16; dense-layer 1x1 weights are
# zero-row-padded to the block's final slab width.
# --------------------------------------------------------------------------
def _kaiming(key, fan_in, shape):
    return (jax.random.normal(key, shape, jnp.float32)
            * jnp.sqrt(2.0 / fan_in)).astype(jnp.bfloat16)


def make_params(seed=0):
    keys = iter(jax.random.split(jax.random.PRNGKey(seed), 256))

    def dense_layer_params(cin, cf):
        w1 = (jax.random.normal(next(keys), (cin, GROWTH), jnp.float32)
              * jnp.sqrt(2.0 / cin))
        w1p = jnp.zeros((cf, GROWTH), jnp.float32).at[:cin].set(w1)
        return {
            "w1p": w1p.astype(jnp.bfloat16),   # zero-row-padded to slab width
            "g1": jnp.ones((GROWTH,), jnp.float32),
            "b1": jnp.zeros((GROWTH,), jnp.float32),
            "w2": _kaiming(next(keys), 9 * GROWTH, (9 * GROWTH, GROWTH)),
            "g2": jnp.ones((GROWTH,), jnp.float32),
            "b2": jnp.zeros((GROWTH,), jnp.float32),
        }

    def block_params(c0, num_layers):
        cf = c0 + GROWTH * num_layers
        return [dense_layer_params(c0 + GROWTH * i, cf)
                for i in range(num_layers)]

    def transition_params(cin):
        cout = cin // 2
        return {
            "w": _kaiming(next(keys), cin, (cin, cout)),
            "g": jnp.ones((cout,), jnp.float32),
            "b": jnp.zeros((cout,), jnp.float32),
        }

    return {
        "stem_w": _kaiming(next(keys), 7 * 7 * 3, (7 * 7 * 3, 64)),
        "stem_g": jnp.ones((64,), jnp.float32),
        "stem_b": jnp.zeros((64,), jnp.float32),
        "block0": block_params(64, 6),      # -> 256
        "trans0": transition_params(256),   # -> 128
        "block1": block_params(128, 12),    # -> 512
        "trans1": transition_params(512),   # -> 256
        "block2": block_params(256, 24),    # -> 1024
        "trans2": transition_params(1024),  # -> 512
        "block3": block_params(512, 16),    # -> 1024
        "final_g": jnp.ones((1024,), jnp.float32),
        "final_b": jnp.zeros((1024,), jnp.float32),
        "fc_w": jax.random.normal(next(keys), (1024, 3), jnp.float32) * 0.02,
        "fc_b": jnp.zeros((3,), jnp.float32),
    }


# --------------------------------------------------------------------------
if __name__ == "__main__":
    params = make_params(seed=0)

    # Input matches PyTorch convention: NCHW, 3 channels, small spatial size.
    x = jax.random.normal(jax.random.PRNGKey(0), (2, 3, 32, 32), jnp.float32)

    logits = densenet121_forward(x, params)
    logits = jax.block_until_ready(logits)

    assert logits.shape == (2, 3), logits.shape
    assert bool(jnp.all(jnp.isfinite(logits)))
    print("KERNEL_OK")
</pallas_src>

<mosaic_0001>
module attributes {stable_mosaic.version = 11 : i64} {
  func.func @_matmul_kernel(%arg0: i32, %arg1: memref<512x147xbf16, #tpu.memory_space<vmem>>, %arg2: memref<147x64xbf16, #tpu.memory_space<vmem>>, %arg3: memref<512x64xf32, #tpu.memory_space<vmem>>) attributes {dimension_semantics = [#tpu.dimension_semantics<parallel>], iteration_bounds = array<i64: 1>, scalar_prefetch = 0 : i64, scratch_operands = 0 : i64, tpu.core_type = #tpu.core_type<tc>, window_params = [{transform_indices = @transform_0, window_bounds = array<i64: 512, 147>}, {pipeline_mode = #tpu.pipeline_mode<synchronous>, transform_indices = @transform_1, window_bounds = array<i64: 147, 64>}, {transform_indices = @transform_2, window_bounds = array<i64: 512, 64>}]} {
    %c0 = arith.constant 0 : index
    %c0_0 = arith.constant 0 : index
    %0 = vector.load %arg1[%c0, %c0_0] : memref<512x147xbf16, #tpu.memory_space<vmem>>, vector<512x147xbf16>
    %c0_1 = arith.constant 0 : index
    %c0_2 = arith.constant 0 : index
    %1 = vector.load %arg2[%c0_1, %c0_2] : memref<147x64xbf16, #tpu.memory_space<vmem>>, vector<147x64xbf16>
    %cst = arith.constant dense<0.000000e+00> : vector<512x64xf32>
    %2 = tpu.matmul %0, %1, %cst {dimension_numbers = #tpu.dot_dimension_numbers<[1], [0], [0], [1], [0, 0, 1, 1], [], []>} : vector<512x147xbf16>, vector<147x64xbf16>, vector<512x64xf32> -> vector<512x64xf32>
    %c0_3 = arith.constant 0 : index
    %c0_4 = arith.constant 0 : index
    %3 = vector.load %arg3[%c0_3, %c0_4] : memref<512x64xf32, #tpu.memory_space<vmem>>, vector<512x64xf32>
    tpu.vector_store %arg3[%c0_3, %c0_4], %2 {strides = array<i32>} : memref<512x64xf32, #tpu.memory_space<vmem>>, vector<512x64xf32>,
    return
  }
  func.func @transform_0(%arg0: i32) -> (i32, i32) {
    %c0_i32 = arith.constant 0 : i32
    %c0_i32_0 = arith.constant 0 : i32
    return %arg0, %c0_i32 : i32, i32
  }
  func.func @transform_1(%arg0: i32) -> (i32, i32) {
    %c0_i32 = arith.constant 0 : i32
    %c0_i32_0 = arith.constant 0 : i32
    %c0_i32_1 = arith.constant 0 : i32
    return %c0_i32, %c0_i32_0 : i32, i32
  }
  func.func @transform_2(%arg0: i32) -> (i32, i32) {
    %c0_i32 = arith.constant 0 : i32
    %c0_i32_0 = arith.constant 0 : i32
    return %arg0, %c0_i32 : i32, i32
  }
}

</mosaic_0001>

<llo_original>
// kernel: tpu_custom_call.1
$region0: #{tpu_custom_call.1}
  #allocation0 [shape = 'u32[]', space=smem, size = 0x4, offset = 0x4, fixed_abs, tag = 'smem constant byte address 0x4 - core index']
  #allocation1 [shape = 'u32[144,128]{1,0:T(1,128)}', space=vmem, size = 0x12000, scoped, tag = 'internal scratch']
  %s0 = inlined_call_operand.vmem [shape: bf16[512,147], index: 0, kind: input, shape index: {}]
  %s1 = inlined_call_operand.vmem [shape: bf16[147,64], index: 1, kind: input, shape index: {}]
  %s2 = inlined_call_operand.vmem [shape: f32[512,64], index: 2, kind: output, shape index: {}]
  %s3 = sld [smem:[#allocation0]]
  $region18: #{tpu_custom_call.1} parent=0
    _
  %s5 = ssub.s32 1, %s3
  %s6 = scalar_select 0, %s5, %s3
  // Predicated region
  $region2: #{tpu_custom_call.1} parent=0 // pred_check
    _
  $region3: #{tpu_custom_call.1} parent=0 // pred_check_branch
    %8 = sbr.rel (0) target = $region5
  $region4: #{tpu_custom_call.1} parent=0 // pred_region
    _
  $region5: #{tpu_custom_call.1} parent=0 // pred_fallthru
    _
  // Predicated region
  $region6: #{tpu_custom_call.1} parent=0 // pred_check
    _
  $region7: #{tpu_custom_call.1} parent=0 // pred_check_branch
    %10 = sbr.rel (0) target = $region9
  $region8: #{tpu_custom_call.1} parent=0 // pred_region
    _
  $region9: #{tpu_custom_call.1} parent=0 // pred_fallthru
    _
  %v12 = vld [vmem:[%s0] sm:$0xff]
  %v13 = vld [vmem:[%s0 + $0x8] sm:$0xff]
  %v14 = vld [vmem:[%s0 + $0x10] sm:$0xff]
  %v15 = vld [vmem:[%s0 + $0x18] sm:$0xff]
  %v16 = vld [vmem:[%s0 + $0x20] sm:$0xff]
  %v17 = vld [vmem:[%s0 + $0x28] sm:$0xff]
  %v18 = vld [vmem:[%s0 + $0x30] sm:$0xff]
  %v19 = vld [vmem:[%s0 + $0x38] sm:$0xff]
  %v20 = vld [vmem:[%s0 + $0x40] sm:$0xff]
  %v21 = vld [vmem:[%s0 + $0x48] sm:$0xff]
  %v22 = vld [vmem:[%s0 + $0x50] sm:$0xff]
  %v23 = vld [vmem:[%s0 + $0x58] sm:$0xff]
  %v24 = vld [vmem:[%s0 + $0x60] sm:$0xff]
  %v25 = vld [vmem:[%s0 + $0x68] sm:$0xff]
  %v26 = vld [vmem:[%s0 + $0x70] sm:$0xff]
  %v27 = vld [vmem:[%s0 + $0x78] sm:$0xff]
  %v28 = vld [vmem:[%s0 + $0x80] sm:$0xff]
  %v29 = vld [vmem:[%s0 + $0x88] sm:$0xff]
  %v30 = vld [vmem:[%s0 + $0x90] sm:$0xff]
  %v31 = vld [vmem:[%s0 + $0x98] sm:$0xff]
  %v32 = vld [vmem:[%s0 + $0xa0] sm:$0xff]
  %v33 = vld [vmem:[%s0 + $0xa8] sm:$0xff]
  %v34 = vld [vmem:[%s0 + $0xb0] sm:$0xff]
  %v35 = vld [vmem:[%s0 + $0xb8] sm:$0xff]
  %v36 = vld [vmem:[%s0 + $0xc0] sm:$0xff]
  %v37 = vld [vmem:[%s0 + $0xc8] sm:$0xff]
  %v38 = vld [vmem:[%s0 + $0xd0] sm:$0xff]
  %v39 = vld [vmem:[%s0 + $0xd8] sm:$0xff]
  %v40 = vld [vmem:[%s0 + $0xe0] sm:$0xff]
  %v41 = vld [vmem:[%s0 + $0xe8] sm:$0xff]
  %v42 = vld [vmem:[%s0 + $0xf0] sm:$0xff]
  %v43 = vld [vmem:[%s0 + $0xf8] sm:$0xff]
  %v44 = vld [vmem:[%s0 + $0x100] sm:$0xff]
  %v45 = vld [vmem:[%s0 + $0x108] sm:$0xff]
  %v46 = vld [vmem:[%s0 + $0x110] sm:$0xff]
  %v47 = vld [vmem:[%s0 + $0x118] sm:$0xff]
  %v48 = vld [vmem:[%s0 + $0x120] sm:$0xff]
  %v49 = vld [vmem:[%s0 + $0x128] sm:$0xff]
  %v50 = vld [vmem:[%s0 + $0x130] sm:$0xff]
  %v51 = vld [vmem:[%s0 + $0x138] sm:$0xff]
  %v52 = vld [vmem:[%s0 + $0x140] sm:$0xff]
  %v53 = vld [vmem:[%s0 + $0x148] sm:$0xff]
  %v54 = vld [vmem:[%s0 + $0x150] sm:$0xff]
  %v55 = vld [vmem:[%s0 + $0x158] sm:$0xff]
  %v56 = vld [vmem:[%s0 + $0x160] sm:$0xff]
  %v57 = vld [vmem:[%s0 + $0x168] sm:$0xff]
  %v58 = vld [vmem:[%s0 + $0x170] sm:$0xff]
  %v59 = vld [vmem:[%s0 + $0x178] sm:$0xff]
  %v60 = vld [vmem:[%s0 + $0x180] sm:$0xff]
  %v61 = vld [vmem:[%s0 + $0x188] sm:$0xff]
  %v62 = vld [vmem:[%s0 + $0x190] sm:$0xff]
  %v63 = vld [vmem:[%s0 + $0x198] sm:$0xff]
  %v64 = vld [vmem:[%s0 + $0x1a0] sm:$0xff]
  %v65 = vld [vmem:[%s0 + $0x1a8] sm:$0xff]
  %v66 = vld [vmem:[%s0 + $0x1b0] sm:$0xff]
  %v67 = vld [vmem:[%s0 + $0x1b8] sm:$0xff]
  %v68 = vld [vmem:[%s0 + $0x1c0] sm:$0xff]
  %v69 = vld [vmem:[%s0 + $0x1c8] sm:$0xff]
  %v70 = vld [vmem:[%s0 + $0x1d0] sm:$0xff]
  %v71 = vld [vmem:[%s0 + $0x1d8] sm:$0xff]
  %v72 = vld [vmem:[%s0 + $0x1e0] sm:$0xff]
  %v73 = vld [vmem:[%s0 + $0x1e8] sm:$0xff]
  %v74 = vld [vmem:[%s0 + $0x1f0] sm:$0xff]
  %v75 = vld [vmem:[%s0 + $0x1f8] sm:$0xff]
  %v76 = vld [vmem:[%s1] sm:$0xf]
  %v77 = vld [vmem:[%s1 + $0x4] sm:$0xf]
  %v78 = vld [vmem:[%s1 + $0x8] sm:$0xf]
  %v79 = vld [vmem:[%s1 + $0xc] sm:$0xf]
  %v80 = vld [vmem:[%s1 + $0x10] sm:$0xf]
  %v81 = vld [vmem:[%s1 + $0x14] sm:$0xf]
  %v82 = vld [vmem:[%s1 + $0x18] sm:$0xf]
  %v83 = vld [vmem:[%s1 + $0x1c] sm:$0xf]
  %v84 = vld [vmem:[%s1 + $0x20] sm:$0xf]
  %v85 = vld [vmem:[%s1 + $0x24] sm:$0xf]
  %v86 = vld [vmem:[%s1 + $0x28] sm:$0xf]
  %v87 = vld [vmem:[%s1 + $0x2c] sm:$0xf]
  %v88 = vld [vmem:[%s1 + $0x30] sm:$0xf]
  %v89 = vld [vmem:[%s1 + $0x34] sm:$0xf]
  %v90 = vld [vmem:[%s1 + $0x38] sm:$0xf]
  %v91 = vld [vmem:[%s1 + $0x3c] sm:$0xf]
  %v92 = vld [vmem:[%s1 + $0x40] sm:$0xf]
  %v93 = vld [vmem:[%s1 + $0x44] sm:$0xf]
  %v94 = vld [vmem:[%s1 + $0x48] sm:$0x3]
  %v159 = vunpack.c.l.b16 %v12
  %v160 = vunpack.c.h.b16 %v12
  %v161 = vunpack.c.l.b16 %v13
  %v162 = vunpack.c.h.b16 %v13
  %v163 = vunpack.c.l.b16 %v14
  %v164 = vunpack.c.h.b16 %v14
  %v165 = vunpack.c.l.b16 %v15
  %v166 = vunpack.c.h.b16 %v15
  %v167 = vunpack.c.l.b16 %v16
  %v168 = vunpack.c.h.b16 %v16
  %v169 = vunpack.c.l.b16 %v17
  %v170 = vunpack.c.h.b16 %v17
  %v171 = vunpack.c.l.b16 %v18
  %v172 = vunpack.c.h.b16 %v18
  %v173 = vunpack.c.l.b16 %v19
  %v174 = vunpack.c.h.b16 %v19
  %v175 = vunpack.c.l.b16 %v20
  %v176 = vunpack.c.h.b16 %v20
  %v177 = vunpack.c.l.b16 %v21
  %v178 = vunpack.c.h.b16 %v21
  %v179 = vunpack.c.l.b16 %v22
  %v180 = vunpack.c.h.b16 %v22
  %v181 = vunpack.c.l.b16 %v23
  %v182 = vunpack.c.h.b16 %v23
  %v183 = vunpack.c.l.b16 %v24
  %v184 = vunpack.c.h.b16 %v24
  %v185 = vunpack.c.l.b16 %v25
  %v186 = vunpack.c.h.b16 %v25
  %v187 = vunpack.c.l.b16 %v26
  %v188 = vunpack.c.h.b16 %v26
  %v189 = vunpack.c.l.b16 %v27
  %v190 = vunpack.c.h.b16 %v27
  %v191 = vunpack.c.l.b16 %v28
  %v192 = vunpack.c.h.b16 %v28
  %v193 = vunpack.c.l.b16 %v29
  %v194 = vunpack.c.h.b16 %v29
  %v195 = vunpack.c.l.b16 %v30
  %v196 = vunpack.c.h.b16 %v30
  %v197 = vunpack.c.l.b16 %v31
  %v198 = vunpack.c.h.b16 %v31
  %v199 = vunpack.c.l.b16 %v32
  %v200 = vunpack.c.h.b16 %v32
  %v201 = vunpack.c.l.b16 %v33
  %v202 = vunpack.c.h.b16 %v33
  %v203 = vunpack.c.l.b16 %v34
  %v204 = vunpack.c.h.b16 %v34
  %v205 = vunpack.c.l.b16 %v35
  %v206 = vunpack.c.h.b16 %v35
  %v207 = vunpack.c.l.b16 %v36
  %v208 = vunpack.c.h.b16 %v36
  %v209 = vunpack.c.l.b16 %v37
  %v210 = vunpack.c.h.b16 %v37
  %v211 = vunpack.c.l.b16 %v38
  %v212 = vunpack.c.h.b16 %v38
  %v213 = vunpack.c.l.b16 %v39
  %v214 = vunpack.c.h.b16 %v39
  %v215 = vunpack.c.l.b16 %v40
  %v216 = vunpack.c.h.b16 %v40
  %v217 = vunpack.c.l.b16 %v41
  %v218 = vunpack.c.h.b16 %v41
  %v219 = vunpack.c.l.b16 %v42
  %v220 = vunpack.c.h.b16 %v42
  %v221 = vunpack.c.l.b16 %v43
  %v222 = vunpack.c.h.b16 %v43
  %v223 = vunpack.c.l.b16 %v44
  %v224 = vunpack.c.h.b16 %v44
  %v225 = vunpack.c.l.b16 %v45
  %v226 = vunpack.c.h.b16 %v45
  %v227 = vunpack.c.l.b16 %v46
  %v228 = vunpack.c.h.b16 %v46
  %v229 = vunpack.c.l.b16 %v47
  %v230 = vunpack.c.h.b16 %v47
  %v231 = vunpack.c.l.b16 %v48
  %v232 = vunpack.c.h.b16 %v48
  %v233 = vunpack.c.l.b16 %v49
  %v234 = vunpack.c.h.b16 %v49
  %v235 = vunpack.c.l.b16 %v50
  %v236 = vunpack.c.h.b16 %v50
  %v237 = vunpack.c.l.b16 %v51
  %v238 = vunpack.c.h.b16 %v51
  %v239 = vunpack.c.l.b16 %v52
  %v240 = vunpack.c.h.b16 %v52
  %v241 = vunpack.c.l.b16 %v53
  %v242 = vunpack.c.h.b16 %v53
  %v243 = vunpack.c.l.b16 %v54
  %v244 = vunpack.c.h.b16 %v54
  %v245 = vunpack.c.l.b16 %v55
  %v246 = vunpack.c.h.b16 %v55
  %v247 = vunpack.c.l.b16 %v56
  %v248 = vunpack.c.h.b16 %v56
  %v249 = vunpack.c.l.b16 %v57
  %v250 = vunpack.c.h.b16 %v57
  %v251 = vunpack.c.l.b16 %v58
  %v252 = vunpack.c.h.b16 %v58
  %v253 = vunpack.c.l.b16 %v59
  %v254 = vunpack.c.h.b16 %v59
  %v255 = vunpack.c.l.b16 %v60
  %v256 = vunpack.c.h.b16 %v60
  %v257 = vunpack.c.l.b16 %v61
  %v258 = vunpack.c.h.b16 %v61
  %v259 = vunpack.c.l.b16 %v62
  %v260 = vunpack.c.h.b16 %v62
  %v261 = vunpack.c.l.b16 %v63
  %v262 = vunpack.c.h.b16 %v63
  %v263 = vunpack.c.l.b16 %v64
  %v264 = vunpack.c.h.b16 %v64
  %v265 = vunpack.c.l.b16 %v65
  %v266 = vunpack.c.h.b16 %v65
  %v267 = vunpack.c.l.b16 %v66
  %v268 = vunpack.c.h.b16 %v66
  %v269 = vunpack.c.l.b16 %v67
  %v270 = vunpack.c.h.b16 %v67
  %v271 = vunpack.c.l.b16 %v68
  %v272 = vunpack.c.h.b16 %v68
  %v273 = vunpack.c.l.b16 %v69
  %v274 = vunpack.c.h.b16 %v69
  %v275 = vunpack.c.l.b16 %v70
  %v276 = vunpack.c.h.b16 %v70
  %v277 = vunpack.c.l.b16 %v71
  %v278 = vunpack.c.h.b16 %v71
  %v279 = vunpack.c.l.b16 %v72
  %v280 = vunpack.c.h.b16 %v72
  %v281 = vunpack.c.l.b16 %v73
  %v282 = vunpack.c.h.b16 %v73
  %v283 = vunpack.c.l.b16 %v74
  %v284 = vunpack.c.h.b16 %v74
  %v285 = vunpack.c.l.b16 %v75
  %v286 = vunpack.c.h.b16 %v75
  %v287 = vpack.c.b16 %v161, %v159
  %v288 = vpack.c.b16 %v162, %v160
  %v289 = vpack.c.b16 %v165, %v163
  %v290 = vpack.c.b16 %v166, %v164
  %v291 = vpack.c.b16 %v169, %v167
  %v292 = vpack.c.b16 %v170, %v168
  %v293 = vpack.c.b16 %v173, %v171
  %v294 = vpack.c.b16 %v174, %v172
  %v295 = vpack.c.b16 %v177, %v175
  %v296 = vpack.c.b16 %v178, %v176
  %v297 = vpack.c.b16 %v181, %v179
  %v298 = vpack.c.b16 %v182, %v180
  %v299 = vpack.c.b16 %v185, %v183
  %v300 = vpack.c.b16 %v186, %v184
  %v301 = vpack.c.b16 %v189, %v187
  %v302 = vpack.c.b16 %v190, %v188
  %v303 = vpack.c.b16 %v193, %v191
  %v304 = vpack.c.b16 %v194, %v192
  %v305 = vpack.c.b16 %v197, %v195
  %v306 = vpack.c.b16 %v198, %v196
  %v307 = vpack.c.b16 %v201, %v199
  %v308 = vpack.c.b16 %v202, %v200
  %v309 = vpack.c.b16 %v205, %v203
  %v310 = vpack.c.b16 %v206, %v204
  %v311 = vpack.c.b16 %v209, %v207
  %v312 = vpack.c.b16 %v210, %v208
  %v313 = vpack.c.b16 %v213, %v211
  %v314 = vpack.c.b16 %v214, %v212
  %v315 = vpack.c.b16 %v217, %v215
  %v316 = vpack.c.b16 %v218, %v216
  %v317 = vpack.c.b16 %v221, %v219
  %v318 = vpack.c.b16 %v222, %v220
  %v319 = vpack.c.b16 %v225, %v223
  %v320 = vpack.c.b16 %v226, %v224
  %v321 = vpack.c.b16 %v229, %v227
  %v322 = vpack.c.b16 %v230, %v228
  %v323 = vpack.c.b16 %v233, %v231
  %v324 = vpack.c.b16 %v234, %v232
  %v325 = vpack.c.b16 %v237, %v235
  %v326 = vpack.c.b16 %v238, %v236
  %v327 = vpack.c.b16 %v241, %v239
  %v328 = vpack.c.b16 %v242, %v240
  %v329 = vpack.c.b16 %v245, %v243
  %v330 = vpack.c.b16 %v246, %v244
  %v331 = vpack.c.b16 %v249, %v247
  %v332 = vpack.c.b16 %v250, %v248
  %v333 = vpack.c.b16 %v253, %v251
  %v334 = vpack.c.b16 %v254, %v252
  %v335 = vpack.c.b16 %v257, %v255
  %v336 = vpack.c.b16 %v258, %v256
  %v337 = vpack.c.b16 %v261, %v259
  %v338 = vpack.c.b16 %v262, %v260
  %v339 = vpack.c.b16 %v265, %v263
  %v340 = vpack.c.b16 %v266, %v264
  %v341 = vpack.c.b16 %v269, %v267
  %v342 = vpack.c.b16 %v270, %v268
  %v343 = vpack.c.b16 %v273, %v271
  %v344 = vpack.c.b16 %v274, %v272
  %v345 = vpack.c.b16 %v277, %v275
  %v346 = vpack.c.b16 %v278, %v276
  %v347 = vpack.c.b16 %v281, %v279
  %v348 = vpack.c.b16 %v282, %v280
  %v349 = vpack.c.b16 %v285, %v283
  %v350 = vpack.c.b16 %v286, %v284
  %v402 = vunpack.c.l.b16 %v76
  %v403 = vunpack.c.l.b16 %v77
  %v404 = vunpack.c.l.b16 %v78
  %v405 = vunpack.c.l.b16 %v79
  %v406 = vunpack.c.l.b16 %v80
  %v407 = vunpack.c.l.b16 %v81
  %v408 = vunpack.c.l.b16 %v82
  %v409 = vunpack.c.l.b16 %v83
  %v410 = vunpack.c.l.b16 %v84
  %v411 = vunpack.c.l.b16 %v85
  %v412 = vunpack.c.l.b16 %v86
  %v413 = vunpack.c.l.b16 %v87
  %v414 = vunpack.c.l.b16 %v88
  %v415 = vunpack.c.l.b16 %v89
  %v416 = vunpack.c.l.b16 %v90
  %v417 = vunpack.c.l.b16 %v91
  %v418 = vunpack.c.l.b16 %v92
  %v419 = vunpack.c.l.b16 %v93
  %v420 = vunpack.c.l.b16 %v94
  %v421 = vpack.c.b16 %v403, %v402
  %v422 = vpack.c.b16 %v405, %v404
  %v423 = vpack.c.b16 %v407, %v406
  %v424 = vpack.c.b16 %v409, %v408
  %v425 = vpack.c.b16 %v411, %v410
  %v426 = vpack.c.b16 %v413, %v412
  %v427 = vpack.c.b16 %v415, %v414
  %v428 = vpack.c.b16 %v417, %v416
  %v429 = vpack.c.b16 %v419, %v418
  %v430 = vpack.c.b16 %v420, %v420
  %vm440 = vcmask 154624
  %v442 = vsel %vm440, %v288, 0
  %v445 = vsel %vm440, %v290, 0
  %v448 = vsel %vm440, %v292, 0
  %v451 = vsel %vm440, %v294, 0
  %v454 = vsel %vm440, %v296, 0
  %v457 = vsel %vm440, %v298, 0
  %v460 = vsel %vm440, %v300, 0
  %v463 = vsel %vm440, %v302, 0
  %v466 = vsel %vm440, %v304, 0
  %v469 = vsel %vm440, %v306, 0
  %v472 = vsel %vm440, %v308, 0
  %v475 = vsel %vm440, %v310, 0
  %v478 = vsel %vm440, %v312, 0
  %v481 = vsel %vm440, %v314, 0
  %v484 = vsel %vm440, %v316, 0
  %v487 = vsel %vm440, %v318, 0
  %v490 = vsel %vm440, %v320, 0
  %v493 = vsel %vm440, %v322, 0
  %v496 = vsel %vm440, %v324, 0
  %v499 = vsel %vm440, %v326, 0
  %v502 = vsel %vm440, %v328, 0
  %v505 = vsel %vm440, %v330, 0
  %v508 = vsel %vm440, %v332, 0
  %v511 = vsel %vm440, %v334, 0
  %v514 = vsel %vm440, %v336, 0
  %v517 = vsel %vm440, %v338, 0
  %v520 = vsel %vm440, %v340, 0
  %v523 = vsel %vm440, %v342, 0
  %v526 = vsel %vm440, %v344, 0
  %v529 = vsel %vm440, %v346, 0
  %v532 = vsel %vm440, %v348, 0
  %v535 = vsel %vm440, %v350, 0
  %vm537 = vcmask 1040384
  %vm538 = vcmask 1041408
  %v539 = vsel %vm537, 4294967295, 65535
  %v540 = vsel %vm538, %v539, 0
  %v542 = vand.u32 %v430, %v540
  %544 = vmatprep.subr.bf16.mxu0 0
  %545 = vmatpush1.bf16.msra.mxu0 %v421
  %546 = vmatprep.subr.bf16.mxu0 0
  %547 = vmatpush1.bf16.msra.mxu0 %v422
  %548 = vmatprep.subr.bf16.mxu0 0
  %549 = vmatpush1.bf16.msra.mxu0 %v423
  %550 = vmatprep.subr.bf16.mxu0 0
  %551 = vmatpush1.bf16.msra.mxu0 %v424
  %552 = vmatprep.subr.bf16.mxu0 0
  %553 = vmatpush1.bf16.msra.mxu0 %v425
  %554 = vmatprep.subr.bf16.mxu0 0
  %555 = vmatpush1.bf16.msra.mxu0 %v426
  %556 = vmatprep.subr.bf16.mxu0 0
  %557 = vmatpush1.bf16.msra.mxu0 %v427
  %558 = vmatprep.subr.bf16.mxu0 0
  %559 = vmatpush1.bf16.msra.mxu0 %v428
  %560 = vmatprep.subr.bf16.mxu0 0
  %561 = vmatpush1.bf16.msra.mxu0 %v429
  %562 = vmatprep.subr.bf16.mxu0 0
  %563 = vmatpush1.bf16.msra.mxu0 %v542
  %564 = vmatprep.subr.bf16.mxu0 0
  %565 = vmatpush1.bf16.msra.mxu0 0
  %566 = vmatprep.subr.bf16.mxu0 0
  %567 = vmatpush1.bf16.msra.mxu0 0
  %568 = vmatprep.subr.bf16.mxu0 0
  %569 = vmatpush1.bf16.msra.mxu0 0
  %570 = vmatprep.subr.bf16.mxu0 0
  %571 = vmatpush1.bf16.msra.mxu0 0
  %572 = vmatprep.subr.bf16.mxu0 0
  %573 = vmatpush1.bf16.msra.mxu0 0
  %574 = vmatprep.subr.bf16.mxu0 0
  %575 = vmatpush1.bf16.msra.mxu0 0
  %576 = vmatprep.mubr.bf16.mxu0 %v442
  %577 = vmatmul.mubr.bf16.gmra.mrb[0].mxu0 %v287
  %v578 = vpop.f32.mrb[0].mxu0
  %v579 = vadd.f32 0.0, %v578
  %v580 = vpop.f32.mrb[0].mxu0
  %v581 = vpop.f32.mrb[0].mxu0
  %v582 = vadd.f32 0.0, %v581
  %v583 = vpop.f32.mrb[0].mxu0
  %584 = vmatprep.mubr.bf16.mxu0 %v445
  %585 = vmatmul.mubr.bf16.gmra.mrb[0].mxu0 %v289
  %v586 = vpop.f32.mrb[0].mxu0
  %v587 = vadd.f32 0.0, %v586
  %v588 = vpop.f32.mrb[0].mxu0
  %v589 = vpop.f32.mrb[0].mxu0
  %v590 = vadd.f32 0.0, %v589
  %v591 = vpop.f32.mrb[0].mxu0
  %592 = vmatprep.mubr.bf16.mxu0 %v448
  %593 = vmatmul.mubr.bf16.gmra.mrb[0].mxu0 %v291
  %v594 = vpop.f32.mrb[0].mxu0
  %v595 = vadd.f32 0.0, %v594
  %v596 = vpop.f32.mrb[0].mxu0
  %v597 = vpop.f32.mrb[0].mxu0
  %v598 = vadd.f32 0.0, %v597
  %v599 = vpop.f32.mrb[0].mxu0
  %600 = vmatprep.mubr.bf16.mxu0 %v451
  %601 = vmatmul.mubr.bf16.gmra.mrb[0].mxu0 %v293
  %v602 = vpop.f32.mrb[0].mxu0
  %v603 = vadd.f32 0.0, %v602
  %v604 = vpop.f32.mrb[0].mxu0
  %v605 = vpop.f32.mrb[0].mxu0
  %v606 = vadd.f32 0.0, %v605
  %v607 = vpop.f32.mrb[0].mxu0
  %608 = vmatprep.mubr.bf16.mxu0 %v454
  %609 = vmatmul.mubr.bf16.gmra.mrb[0].mxu0 %v295
  %v610 = vpop.f32.mrb[0].mxu0
  %v611 = vadd.f32 0.0, %v610
  %v612 = vpop.f32.mrb[0].mxu0
  %v613 = vpop.f32.mrb[0].mxu0
  %v614 = vadd.f32 0.0, %v613
  %v615 = vpop.f32.mrb[0].mxu0
  %616 = vmatprep.mubr.bf16.mxu0 %v457
  %617 = vmatmul.mubr.bf16.gmra.mrb[0].mxu0 %v297
  %v618 = vpop.f32.mrb[0].mxu0
  %v619 = vadd.f32 0.0, %v618
  %v620 = vpop.f32.mrb[0].mxu0
  %v621 = vpop.f32.mrb[0].mxu0
  %v622 = vadd.f32 0.0, %v621
  %v623 = vpop.f32.mrb[0].mxu0
  %624 = vmatprep.mubr.bf16.mxu0 %v460
  %625 = vmatmul.mubr.bf16.gmra.mrb[0].mxu0 %v299
  %v626 = vpop.f32.mrb[0].mxu0
  %v627 = vadd.f32 0.0, %v626
  %v628 = vpop.f32.mrb[0].mxu0
  %v629 = vpop.f32.mrb[0].mxu0
  %v630 = vadd.f32 0.0, %v629
  %v631 = vpop.f32.mrb[0].mxu0
  %632 = vmatprep.mubr.bf16.mxu0 %v463
  %633 = vmatmul.mubr.bf16.gmra.mrb[0].mxu0 %v301
  %v634 = vpop.f32.mrb[0].mxu0
  %v635 = vadd.f32 0.0, %v634
  %v636 = vpop.f32.mrb[0].mxu0
  %v637 = vpop.f32.mrb[0].mxu0
  %v638 = vadd.f32 0.0, %v637
  %v639 = vpop.f32.mrb[0].mxu0
  %640 = vmatprep.mubr.bf16.mxu0 %v466
  %641 = vmatmul.mubr.bf16.gmra.mrb[0].mxu0 %v303
  %v642 = vpop.f32.mrb[0].mxu0
  %v643 = vadd.f32 0.0, %v642
  %v644 = vpop.f32.mrb[0].mxu0
  %v645 = vpop.f32.mrb[0].mxu0
  %v646 = vadd.f32 0.0, %v645
  %v647 = vpop.f32.mrb[0].mxu0
  %648 = vmatprep.mubr.bf16.mxu0 %v469
  %649 = vmatmul.mubr.bf16.gmra.mrb[0].mxu0 %v305
  %v650 = vpop.f32.mrb[0].mxu0
  %v651 = vadd.f32 0.0, %v650
  %v652 = vpop.f32.mrb[0].mxu0
  %v653 = vpop.f32.mrb[0].mxu0
  %v654 = vadd.f32 0.0, %v653
  %v655 = vpop.f32.mrb[0].mxu0
  %656 = vmatprep.mubr.bf16.mxu0 %v472
  %657 = vmatmul.mubr.bf16.gmra.mrb[0].mxu0 %v307
  %v658 = vpop.f32.mrb[0].mxu0
  %v659 = vadd.f32 0.0, %v658
  %v660 = vpop.f32.mrb[0].mxu0
  %v661 = vpop.f32.mrb[0].mxu0
  %v662 = vadd.f32 0.0, %v661
  %v663 = vpop.f32.mrb[0].mxu0
  %664 = vmatprep.mubr.bf16.mxu0 %v475
  %665 = vmatmul.mubr.bf16.gmra.mrb[0].mxu0 %v309
  %v666 = vpop.f32.mrb[0].mxu0
  %v667 = vadd.f32 0.0, %v666
  %v668 = vpop.f32.mrb[0].mxu0
  %v669 = vpop.f32.mrb[0].mxu0
  %v670 = vadd.f32 0.0, %v669
  %v671 = vpop.f32.mrb[0].mxu0
  %672 = vmatprep.mubr.bf16.mxu0 %v478
  %673 = vmatmul.mubr.bf16.gmra.mrb[0].mxu0 %v311
  %v674 = vpop.f32.mrb[0].mxu0
  %v675 = vadd.f32 0.0, %v674
  %v676 = vpop.f32.mrb[0].mxu0
  %v677 = vpop.f32.mrb[0].mxu0
  %v678 = vadd.f32 0.0, %v677
  %v679 = vpop.f32.mrb[0].mxu0
  %680 = vmatprep.mubr.bf16.mxu0 %v481
  %681 = vmatmul.mubr.bf16.gmra.mrb[0].mxu0 %v313
  %v682 = vpop.f32.mrb[0].mxu0
  %v683 = vadd.f32 0.0, %v682
  %v684 = vpop.f32.mrb[0].mxu0
  %v685 = vpop.f32.mrb[0].mxu0
  %v686 = vadd.f32 0.0, %v685
  %v687 = vpop.f32.mrb[0].mxu0
  %688 = vmatprep.mubr.bf16.mxu0 %v484
  %689 = vmatmul.mubr.bf16.gmra.mrb[0].mxu0 %v315
  %v690 = vpop.f32.mrb[0].mxu0
  %v691 = vadd.f32 0.0, %v690
  %v692 = vpop.f32.mrb[0].mxu0
  %v693 = vpop.f32.mrb[0].mxu0
  %v694 = vadd.f32 0.0, %v693
  %v695 = vpop.f32.mrb[0].mxu0
  %696 = vmatprep.mubr.bf16.mxu0 %v487
  %697 = vmatmul.mubr.bf16.gmra.mrb[0].mxu0 %v317
  %v698 = vpop.f32.mrb[0].mxu0
  %v699 = vadd.f32 0.0, %v698
  %v700 = vpop.f32.mrb[0].mxu0
  %v701 = vpop.f32.mrb[0].mxu0
  %v702 = vadd.f32 0.0, %v701
  %v703 = vpop.f32.mrb[0].mxu0
  %704 = vmatprep.mubr.bf16.mxu0 %v490
  %705 = vmatmul.mubr.bf16.gmra.mrb[0].mxu0 %v319
  %v706 = vpop.f32.mrb[0].mxu0
  %v707 = vadd.f32 0.0, %v706
  %v708 = vpop.f32.mrb[0].mxu0
  %v709 = vpop.f32.mrb[0].mxu0
  %v710 = vadd.f32 0.0, %v709
  %v711 = vpop.f32.mrb[0].mxu0
  %712 = vmatprep.mubr.bf16.mxu0 %v493
  %713 = vmatmul.mubr.bf16.gmra.mrb[0].mxu0 %v321
  %v714 = vpop.f32.mrb[0].mxu0
  %v715 = vadd.f32 0.0, %v714
  %v716 = vpop.f32.mrb[0].mxu0
  %v717 = vpop.f32.mrb[0].mxu0
  %v718 = vadd.f32 0.0, %v717
  %v719 = vpop.f32.mrb[0].mxu0
  %720 = vmatprep.mubr.bf16.mxu0 %v496
  %721 = vmatmul.mubr.bf16.gmra.mrb[0].mxu0 %v323
  %v722 = vpop.f32.mrb[0].mxu0
  %v723 = vadd.f32 0.0, %v722
  %v724 = vpop.f32.mrb[0].mxu0
  %v725 = vpop.f32.mrb[0].mxu0
  %v726 = vadd.f32 0.0, %v725
  %v727 = vpop.f32.mrb[0].mxu0
  %728 = vmatprep.mubr.bf16.mxu0 %v499
  %729 = vmatmul.mubr.bf16.gmra.mrb[0].mxu0 %v325
  %v730 = vpop.f32.mrb[0].mxu0
  %v731 = vadd.f32 0.0, %v730
  %v732 = vpop.f32.mrb[0].mxu0
  %v733 = vpop.f32.mrb[0].mxu0
  %v734 = vadd.f32 0.0, %v733
  %v735 = vpop.f32.mrb[0].mxu0
  %736 = vmatprep.mubr.bf16.mxu0 %v502
  %737 = vmatmul.mubr.bf16.gmra.mrb[0].mxu0 %v327
  %v738 = vpop.f32.mrb[0].mxu0
  %v739 = vadd.f32 0.0, %v738
  %v740 = vpop.f32.mrb[0].mxu0
  %v741 = vpop.f32.mrb[0].mxu0
  %v742 = vadd.f32 0.0, %v741
  %v743 = vpop.f32.mrb[0].mxu0
  %744 = vmatprep.mubr.bf16.mxu0 %v505
  %745 = vmatmul.mubr.bf16.gmra.mrb[0].mxu0 %v329
  %v746 = vpop.f32.mrb[0].mxu0
  %v747 = vadd.f32 0.0, %v746
  %v748 = vpop.f32.mrb[0].mxu0
  %v749 = vpop.f32.mrb[0].mxu0
  %v750 = vadd.f32 0.0, %v749
  %v751 = vpop.f32.mrb[0].mxu0
  %752 = vmatprep.mubr.bf16.mxu0 %v508
  %753 = vmatmul.mubr.bf16.gmra.mrb[0].mxu0 %v331
  %v754 = vpop.f32.mrb[0].mxu0
  %v755 = vadd.f32 0.0, %v754
  %v756 = vpop.f32.mrb[0].mxu0
  %v757 = vpop.f32.mrb[0].mxu0
  %v758 = vadd.f32 0.0, %v757
  %v759 = vpop.f32.mrb[0].mxu0
  %760 = vmatprep.mubr.bf16.mxu0 %v511
  %761 = vmatmul.mubr.bf16.gmra.mrb[0].mxu0 %v333
  %v762 = vpop.f32.mrb[0].mxu0
  %v763 = vadd.f32 0.0, %v762
  %v764 = vpop.f32.mrb[0].mxu0
  %v765 = vpop.f32.mrb[0].mxu0
  %v766 = vadd.f32 0.0, %v765
  %v767 = vpop.f32.mrb[0].mxu0
  %768 = vmatprep.mubr.bf16.mxu0 %v514
  %769 = vmatmul.mubr.bf16.gmra.mrb[0].mxu0 %v335
  %v770 = vpop.f32.mrb[0].mxu0
  %v771 = vadd.f32 0.0, %v770
  %v772 = vpop.f32.mrb[0].mxu0
  %v773 = vpop.f32.mrb[0].mxu0
  %v774 = vadd.f32 0.0, %v773
  %v775 = vpop.f32.mrb[0].mxu0
  %776 = vmatprep.mubr.bf16.mxu0 %v517
  %777 = vmatmul.mubr.bf16.gmra.mrb[0].mxu0 %v337
  %v778 = vpop.f32.mrb[0].mxu0
  %v779 = vadd.f32 0.0, %v778
  %v780 = vpop.f32.mrb[0].mxu0
  %v781 = vpop.f32.mrb[0].mxu0
  %v782 = vadd.f32 0.0, %v781
  %v783 = vpop.f32.mrb[0].mxu0
  %784 = vmatprep.mubr.bf16.mxu0 %v520
  %785 = vmatmul.mubr.bf16.gmra.mrb[0].mxu0 %v339
  %v786 = vpop.f32.mrb[0].mxu0
  %v787 = vadd.f32 0.0, %v786
  %v788 = vpop.f32.mrb[0].mxu0
  %v789 = vpop.f32.mrb[0].mxu0
  %v790 = vadd.f32 0.0, %v789
  %v791 = vpop.f32.mrb[0].mxu0
  %792 = vmatprep.mubr.bf16.mxu0 %v523
  %793 = vmatmul.mubr.bf16.gmra.mrb[0].mxu0 %v341
  %v794 = vpop.f32.mrb[0].mxu0
  %v795 = vadd.f32 0.0, %v794
  %v796 = vpop.f32.mrb[0].mxu0
  %v797 = vpop.f32.mrb[0].mxu0
  %v798 = vadd.f32 0.0, %v797
  %v799 = vpop.f32.mrb[0].mxu0
  %800 = vmatprep.mubr.bf16.mxu0 %v526
  %801 = vmatmul.mubr.bf16.gmra.mrb[0].mxu0 %v343
  %v802 = vpop.f32.mrb[0].mxu0
  %v803 = vadd.f32 0.0, %v802
  %v804 = vpop.f32.mrb[0].mxu0
  %v805 = vpop.f32.mrb[0].mxu0
  %v806 = vadd.f32 0.0, %v805
  %v807 = vpop.f32.mrb[0].mxu0
  %808 = vmatprep.mubr.bf16.mxu0 %v529
  %809 = vmatmul.mubr.bf16.gmra.mrb[0].mxu0 %v345
  %v810 = vpop.f32.mrb[0].mxu0
  %v811 = vadd.f32 0.0, %v810
  %v812 = vpop.f32.mrb[0].mxu0
  %v813 = vpop.f32.mrb[0].mxu0
  %v814 = vadd.f32 0.0, %v813
  %v815 = vpop.f32.mrb[0].mxu0
  %816 = vmatprep.mubr.bf16.mxu0 %v532
  %817 = vmatmul.mubr.bf16.gmra.mrb[0].mxu0 %v347
  %v818 = vpop.f32.mrb[0].mxu0
  %v819 = vadd.f32 0.0, %v818
  %v820 = vpop.f32.mrb[0].mxu0
  %v821 = vpop.f32.mrb[0].mxu0
  %v822 = vadd.f32 0.0, %v821
  %v823 = vpop.f32.mrb[0].mxu0
  %824 = vmatprep.mubr.bf16.mxu0 %v535
  %825 = vmatmul.mubr.bf16.gmra.mrb[0].mxu0 %v349
  %v826 = vpop.f32.mrb[0].mxu0
  %v827 = vadd.f32 0.0, %v826
  %v828 = vpop.f32.mrb[0].mxu0
  %v829 = vpop.f32.mrb[0].mxu0
  %v830 = vadd.f32 0.0, %v829
  %v831 = vpop.f32.mrb[0].mxu0
  %832 = vdwg.mxu0
  %vm833 = vcmask 523264
  %834 = vst.msk [vmem:[%s2] sm:$0xff] %vm833, %v579
  %835 = vst.msk [vmem:[%s2 + $0x8] sm:$0xff] %vm833, %v582
  %836 = vst.msk [vmem:[%s2 + $0x10] sm:$0xff] %vm833, %v587
  %837 = vst.msk [vmem:[%s2 + $0x18] sm:$0xff] %vm833, %v590
  %838 = vst.msk [vmem:[%s2 + $0x20] sm:$0xff] %vm833, %v595
  %839 = vst.msk [vmem:[%s2 + $0x28] sm:$0xff] %vm833, %v598
  %840 = vst.msk [vmem:[%s2 + $0x30] sm:$0xff] %vm833, %v603
  %841 = vst.msk [vmem:[%s2 + $0x38] sm:$0xff] %vm833, %v606
  %842 = vst.msk [vmem:[%s2 + $0x40] sm:$0xff] %vm833, %v611
  %843 = vst.msk [vmem:[%s2 + $0x48] sm:$0xff] %vm833, %v614
  %844 = vst.msk [vmem:[%s2 + $0x50] sm:$0xff] %vm833, %v619
  %845 = vst.msk [vmem:[%s2 + $0x58] sm:$0xff] %vm833, %v622
  %846 = vst.msk [vmem:[%s2 + $0x60] sm:$0xff] %vm833, %v627
  %847 = vst.msk [vmem:[%s2 + $0x68] sm:$0xff] %vm833, %v630
  %848 = vst.msk [vmem:[%s2 + $0x70] sm:$0xff] %vm833, %v635
  %849 = vst.msk [vmem:[%s2 + $0x78] sm:$0xff] %vm833, %v638
  %850 = vst.msk [vmem:[%s2 + $0x80] sm:$0xff] %vm833, %v643
  %851 = vst.msk [vmem:[%s2 + $0x88] sm:$0xff] %vm833, %v646
  %852 = vst.msk [vmem:[%s2 + $0x90] sm:$0xff] %vm833, %v651
  %853 = vst.msk [vmem:[%s2 + $0x98] sm:$0xff] %vm833, %v654
  %854 = vst.msk [vmem:[%s2 + $0xa0] sm:$0xff] %vm833, %v659
  %855 = vst.msk [vmem:[%s2 + $0xa8] sm:$0xff] %vm833, %v662
  %856 = vst.msk [vmem:[%s2 + $0xb0] sm:$0xff] %vm833, %v667
  %857 = vst.msk [vmem:[%s2 + $0xb8] sm:$0xff] %vm833, %v670
  %858 = vst.msk [vmem:[%s2 + $0xc0] sm:$0xff] %vm833, %v675
  %859 = vst.msk [vmem:[%s2 + $0xc8] sm:$0xff] %vm833, %v678
  %860 = vst.msk [vmem:[%s2 + $0xd0] sm:$0xff] %vm833, %v683
  %861 = vst.msk [vmem:[%s2 + $0xd8] sm:$0xff] %vm833, %v686
  %862 = vst.msk [vmem:[%s2 + $0xe0] sm:$0xff] %vm833, %v691
  %863 = vst.msk [vmem:[%s2 + $0xe8] sm:$0xff] %vm833, %v694
  %864 = vst.msk [vmem:[%s2 + $0xf0] sm:$0xff] %vm833, %v699
  %865 = vst.msk [vmem:[%s2 + $0xf8] sm:$0xff] %vm833, %v702
  %866 = vst.msk [vmem:[%s2 + $0x100] sm:$0xff] %vm833, %v707
  %867 = vst.msk [vmem:[%s2 + $0x108] sm:$0xff] %vm833, %v710
  %868 = vst.msk [vmem:[%s2 + $0x110] sm:$0xff] %vm833, %v715
  %869 = vst.msk [vmem:[%s2 + $0x118] sm:$0xff] %vm833, %v718
  %870 = vst.msk [vmem:[%s2 + $0x120] sm:$0xff] %vm833, %v723
  %871 = vst.msk [vmem:[%s2 + $0x128] sm:$0xff] %vm833, %v726
  %872 = vst.msk [vmem:[%s2 + $0x130] sm:$0xff] %vm833, %v731
  %873 = vst.msk [vmem:[%s2 + $0x138] sm:$0xff] %vm833, %v734
  %874 = vst.msk [vmem:[%s2 + $0x140] sm:$0xff] %vm833, %v739
  %875 = vst.msk [vmem:[%s2 + $0x148] sm:$0xff] %vm833, %v742
  %876 = vst.msk [vmem:[%s2 + $0x150] sm:$0xff] %vm833, %v747
  %877 = vst.msk [vmem:[%s2 + $0x158] sm:$0xff] %vm833, %v750
  %878 = vst.msk [vmem:[%s2 + $0x160] sm:$0xff] %vm833, %v755
  %879 = vst.msk [vmem:[%s2 + $0x168] sm:$0xff] %vm833, %v758
  %880 = vst.msk [vmem:[%s2 + $0x170] sm:$0xff] %vm833, %v763
  %881 = vst.msk [vmem:[%s2 + $0x178] sm:$0xff] %vm833, %v766
  %882 = vst.msk [vmem:[%s2 + $0x180] sm:$0xff] %vm833, %v771
  %883 = vst.msk [vmem:[%s2 + $0x188] sm:$0xff] %vm833, %v774
  %884 = vst.msk [vmem:[%s2 + $0x190] sm:$0xff] %vm833, %v779
  %885 = vst.msk [vmem:[%s2 + $0x198] sm:$0xff] %vm833, %v782
  %886 = vst.msk [vmem:[%s2 + $0x1a0] sm:$0xff] %vm833, %v787
  %887 = vst.msk [vmem:[%s2 + $0x1a8] sm:$0xff] %vm833, %v790
  %888 = vst.msk [vmem:[%s2 + $0x1b0] sm:$0xff] %vm833, %v795
  %889 = vst.msk [vmem:[%s2 + $0x1b8] sm:$0xff] %vm833, %v798
  %890 = vst.msk [vmem:[%s2 + $0x1c0] sm:$0xff] %vm833, %v803
  %891 = vst.msk [vmem:[%s2 + $0x1c8] sm:$0xff] %vm833, %v806
  %892 = vst.msk [vmem:[%s2 + $0x1d0] sm:$0xff] %vm833, %v811
  %893 = vst.msk [vmem:[%s2 + $0x1d8] sm:$0xff] %vm833, %v814
  %894 = vst.msk [vmem:[%s2 + $0x1e0] sm:$0xff] %vm833, %v819
  %895 = vst.msk [vmem:[%s2 + $0x1e8] sm:$0xff] %vm833, %v822
  %896 = vst.msk [vmem:[%s2 + $0x1f0] sm:$0xff] %vm833, %v827
  %897 = vst.msk [vmem:[%s2 + $0x1f8] sm:$0xff] %vm833, %v830
  // Predicated region
  $region10: #{tpu_custom_call.1} parent=0 // pred_check
    _
  $region11: #{tpu_custom_call.1} parent=0 // pred_check_branch
    %899 = sbr.rel (0) target = $region13
  $region12: #{tpu_custom_call.1} parent=0 // pred_region
    _
  $region13: #{tpu_custom_call.1} parent=0 // pred_fallthru
    _
  // Predicated region
  $region14: #{tpu_custom_call.1} parent=0 // pred_check
    _
  $region15: #{tpu_custom_call.1} parent=0 // pred_check_branch
    %901 = sbr.rel (0) target = $region17
  $region16: #{tpu_custom_call.1} parent=0 // pred_region
    _
  $region17: #{tpu_custom_call.1} parent=0 // pred_fallthru
    _

</llo_original>
